<compile_context>
chip_gen: v6e
topology: v6e:2x2x1
jax: 0.10.0
libtpu: 0.0.40
codegen_flags: <defaults>
</compile_context>

<pallas_src>
import functools
import math

import jax
import jax.numpy as jnp
from jax import lax
from jax.experimental import pallas as pl
from jax.experimental.pallas import tpu as pltpu

BLOCK_SIZE = 256          # max sequence length (tril buffer size in torch)
DROPOUT = 0.2
N_EMBEDDING_DIM = 48


def _head_kernel(*refs, scale, compute_dtype, with_dropout):
    if with_dropout:
        x_ref, wq_ref, wk_ref, wv_ref, drop_ref, o_ref = refs
    else:
        x_ref, wq_ref, wk_ref, wv_ref, o_ref = refs
        drop_ref = None

    # x block: (1, T, C) -> (T, C); cast matmul operands to compute_dtype
    # (bf16 on v6e/v7x), accumulate in f32 on the MXU.
    x = x_ref[0].astype(compute_dtype)
    wq = wq_ref[...].astype(compute_dtype)
    wk = wk_ref[...].astype(compute_dtype)
    wv = wv_ref[...].astype(compute_dtype)

    q = jnp.dot(x, wq, preferred_element_type=jnp.float32)   # (T, H) f32
    k = jnp.dot(x, wk, preferred_element_type=jnp.float32)   # (T, H) f32
    v = jnp.dot(x, wv, preferred_element_type=jnp.float32)   # (T, H) f32

    # scores = q @ k^T * C^-0.5   (contract the head dim, no explicit transpose)
    s = lax.dot_general(
        q.astype(compute_dtype), k.astype(compute_dtype),
        (((1,), (1,)), ((), ())),
        preferred_element_type=jnp.float32,
    ) * jnp.float32(scale)                                    # (T, T) f32

    # Causal mask (== tril[:T, :T] masked_fill with -inf), built in-kernel.
    T = s.shape[0]
    row = lax.broadcasted_iota(jnp.int32, (T, T), 0)
    col = lax.broadcasted_iota(jnp.int32, (T, T), 1)
    s = jnp.where(col <= row, s, -jnp.inf)

    # Softmax in f32 (VPU/EUP).
    s = s - jnp.max(s, axis=-1, keepdims=True)
    p = jnp.exp(s)
    p = p / jnp.sum(p, axis=-1, keepdims=True)

    if with_dropout:
        # drop_ref holds 0 or 1/(1-p) already -> single multiply.
        p = p * drop_ref[0]

    out = jnp.dot(p.astype(compute_dtype), v.astype(compute_dtype),
                  preferred_element_type=jnp.float32)         # (T, H) f32
    o_ref[0] = out.astype(o_ref.dtype)


@functools.partial(jax.jit,
                   static_argnames=("dropout_p", "training", "compute_dtype"))
def head_forward(x, wq, wk, wv, rng_key, *, dropout_p=DROPOUT, training=True,
                 compute_dtype=jnp.bfloat16):
    """x: [B, T, C] f32.  wq/wk/wv: [C, H] (torch weight transposed).
    Returns [B, T, H] f32."""
    B, T, C = x.shape
    H = wq.shape[1]
    scale = 1.0 / math.sqrt(C)             # matches torch: C ** -0.5, C = n_emb
    with_dropout = bool(training) and dropout_p > 0.0

    inputs = [x, wq, wk, wv]
    in_specs = [
        pl.BlockSpec((1, T, C), lambda b: (b, 0, 0)),   # per-batch activation tile
        pl.BlockSpec((C, H), lambda b: (0, 0)),         # weights: resident
        pl.BlockSpec((C, H), lambda b: (0, 0)),
        pl.BlockSpec((C, H), lambda b: (0, 0)),
    ]
    if with_dropout:
        keep = jax.random.bernoulli(rng_key, 1.0 - dropout_p, (B, T, T))
        drop_scale = keep.astype(jnp.float32) * (1.0 / (1.0 - dropout_p))
        inputs.append(drop_scale)
        in_specs.append(pl.BlockSpec((1, T, T), lambda b: (b, 0, 0)))

    flops = B * (3 * 2 * T * C * H        # q, k, v projections
                 + 2 * T * T * H          # q @ k^T
                 + 2 * T * T * H)         # wei @ v
    bytes_accessed = 4 * (B * T * C + 3 * C * H + B * T * H
                          + (B * T * T if with_dropout else 0))

    kernel = functools.partial(_head_kernel, scale=scale,
                               compute_dtype=compute_dtype,
                               with_dropout=with_dropout)

    return pl.pallas_call(
        kernel,
        out_shape=jax.ShapeDtypeStruct((B, T, H), x.dtype),
        grid=(B,),
        in_specs=in_specs,
        out_specs=pl.BlockSpec((1, T, H), lambda b: (b, 0, 0)),
        compiler_params=pltpu.CompilerParams(
            dimension_semantics=("parallel",),       # megacore sharding on v7x
            vmem_limit_bytes=64 * 1024 * 1024,       # fits v7x's 64 MiB budget
        ),
        cost_estimate=pl.CostEstimate(flops=flops,
                                      transcendentals=B * T * T,
                                      bytes_accessed=bytes_accessed),
    )(*inputs)


def head_reference(x, wq, wk, wv):
    """Pure-JAX f32 reference mirroring the PyTorch module (eval mode)."""
    B, T, C = x.shape
    q = x @ wq
    k = x @ wk
    v = x @ wv
    wei = jnp.einsum("bth,bsh->bts", q, k) * (C ** -0.5)
    mask = jnp.tril(jnp.ones((T, T), dtype=bool))
    wei = jnp.where(mask, wei, -jnp.inf)
    wei = jax.nn.softmax(wei, axis=-1)
    return jnp.einsum("bts,bsh->bth", wei, v)


def init_params(key, n_emb=N_EMBEDDING_DIM, head_size=12):
    """nn.Linear(bias=False) init: U(-1/sqrt(fan_in), 1/sqrt(fan_in)).
    Stored as [C, H] (= torch weight transposed) so the kernel is row-major."""
    kq, kk, kv = jax.random.split(key, 3)
    lim = 1.0 / math.sqrt(n_emb)
    wq = jax.random.uniform(kq, (n_emb, head_size), jnp.float32, -lim, lim)
    wk = jax.random.uniform(kk, (n_emb, head_size), jnp.float32, -lim, lim)
    wv = jax.random.uniform(kv, (n_emb, head_size), jnp.float32, -lim, lim)
    return wq, wk, wv


if __name__ == "__main__":
    key = jax.random.PRNGKey(0)
    kx, kp, kd = jax.random.split(key, 3)

    B, T, C, H = 2, 8, N_EMBEDDING_DIM, 12
    x = jax.random.normal(kx, (B, T, C), jnp.float32)
    wq, wk, wv = init_params(kp, n_emb=C, head_size=H)

    ref = head_reference(x, wq, wk, wv)

    # 1) Exact path: f32 matmuls, dropout off -> tight tolerance vs reference.
    y_f32 = head_forward(x, wq, wk, wv, kd, training=False,
                         compute_dtype=jnp.float32)
    jax.block_until_ready(y_f32)
    assert jnp.allclose(y_f32, ref, atol=1e-5, rtol=1e-5), "f32 path mismatch"

    # 2) Perf path: bf16 MXU operands (v6e/v7x fast path) -> looser tolerance.
    y_bf16 = head_forward(x, wq, wk, wv, kd, training=False,
                          compute_dtype=jnp.bfloat16)
    jax.block_until_ready(y_bf16)
    assert jnp.allclose(y_bf16, ref, atol=3e-2, rtol=3e-2), "bf16 path mismatch"

    # 3) Training mode: dropout applied to the attention weights.
    y_train = head_forward(x, wq, wk, wv, kd, training=True,
                           compute_dtype=jnp.bfloat16)
    jax.block_until_ready(y_train)
    assert y_train.shape == (B, T, H)

    print("KERNEL_OK")
</pallas_src>

<mosaic_0001>
module attributes {stable_mosaic.version = 11 : i64} {
  func.func @_head_kernel(%arg0: i32, %arg1: memref<1x8x48xf32, #tpu.memory_space<vmem>>, %arg2: memref<48x12xf32, #tpu.memory_space<vmem>>, %arg3: memref<48x12xf32, #tpu.memory_space<vmem>>, %arg4: memref<48x12xf32, #tpu.memory_space<vmem>>, %arg5: memref<1x8x12xf32, #tpu.memory_space<vmem>>) attributes {dimension_semantics = [#tpu.dimension_semantics<parallel>], iteration_bounds = array<i64: 2>, scalar_prefetch = 0 : i64, scratch_operands = 0 : i64, tpu.core_type = #tpu.core_type<tc>, window_params = [{transform_indices = @transform_0, window_bounds = array<i64: 1, 8, 48>}, {pipeline_mode = #tpu.pipeline_mode<synchronous>, transform_indices = @transform_1, window_bounds = array<i64: 48, 12>}, {pipeline_mode = #tpu.pipeline_mode<synchronous>, transform_indices = @transform_2, window_bounds = array<i64: 48, 12>}, {pipeline_mode = #tpu.pipeline_mode<synchronous>, transform_indices = @transform_3, window_bounds = array<i64: 48, 12>}, {transform_indices = @transform_4, window_bounds = array<i64: 1, 8, 12>}]} {
    %c0 = arith.constant 0 : index
    %c0_0 = arith.constant 0 : index
    %c0_1 = arith.constant 0 : index
    %0 = vector.load %arg1[%c0, %c0_0, %c0_1] : memref<1x8x48xf32, #tpu.memory_space<vmem>>, vector<1x8x48xf32>
    %1 = vector.shape_cast %0 : vector<1x8x48xf32> to vector<8x48xf32>
    %c0_2 = arith.constant 0 : index
    %c0_3 = arith.constant 0 : index
    %2 = vector.load %arg2[%c0_2, %c0_3] : memref<48x12xf32, #tpu.memory_space<vmem>>, vector<48x12xf32>
    %c0_4 = arith.constant 0 : index
    %c0_5 = arith.constant 0 : index
    %3 = vector.load %arg3[%c0_4, %c0_5] : memref<48x12xf32, #tpu.memory_space<vmem>>, vector<48x12xf32>
    %c0_6 = arith.constant 0 : index
    %c0_7 = arith.constant 0 : index
    %4 = vector.load %arg4[%c0_6, %c0_7] : memref<48x12xf32, #tpu.memory_space<vmem>>, vector<48x12xf32>
    %cst = arith.constant dense<0.000000e+00> : vector<8x12xf32>
    %5 = tpu.matmul %1, %2, %cst {dimension_numbers = #tpu.dot_dimension_numbers<[1], [0], [0], [1], [0, 0, 1, 1], [], []>} : vector<8x48xf32>, vector<48x12xf32>, vector<8x12xf32> -> vector<8x12xf32>
    %cst_8 = arith.constant dense<0.000000e+00> : vector<8x12xf32>
    %6 = tpu.matmul %1, %3, %cst_8 {dimension_numbers = #tpu.dot_dimension_numbers<[1], [0], [0], [1], [0, 0, 1, 1], [], []>} : vector<8x48xf32>, vector<48x12xf32>, vector<8x12xf32> -> vector<8x12xf32>
    %cst_9 = arith.constant dense<0.000000e+00> : vector<8x12xf32>
    %7 = tpu.matmul %1, %4, %cst_9 {dimension_numbers = #tpu.dot_dimension_numbers<[1], [0], [0], [1], [0, 0, 1, 1], [], []>} : vector<8x48xf32>, vector<48x12xf32>, vector<8x12xf32> -> vector<8x12xf32>
    %cst_10 = arith.constant dense<0.000000e+00> : vector<8x8xf32>
    %8 = tpu.matmul %5, %6, %cst_10 {dimension_numbers = #tpu.dot_dimension_numbers<[1], [1], [0], [0], [0, 0, 1, 0], [], []>} : vector<8x12xf32>, vector<8x12xf32>, vector<8x8xf32> -> vector<8x8xf32>
    %cst_11 = arith.constant 0.144337565 : f32
    %9 = vector.broadcast %cst_11 : f32 to vector<8x8xf32>
    %10 = arith.mulf %8, %9 : vector<8x8xf32>
    %11 = tpu.iota {dimensions = array<i32: 0>} : vector<8x8xi32>
    %12 = tpu.iota {dimensions = array<i32: 1>} : vector<8x8xi32>
    %13 = arith.cmpi sle, %12, %11 : vector<8x8xi32>
    %cst_12 = arith.constant 0xFF800000 : f32
    %14 = vector.broadcast %cst_12 : f32 to vector<8x8xf32>
    %15 = arith.select %13, %10, %14 : vector<8x8xi1>, vector<8x8xf32>
    %cst_13 = arith.constant dense<0xFF800000> : vector<8xf32>
    %16 = vector.multi_reduction <maximumf>, %15, %cst_13 [1] : vector<8x8xf32> to vector<8xf32>
    %17 = vector.shape_cast %16 : vector<8xf32> to vector<8x1xf32>
    %18 = vector.broadcast %17 : vector<8x1xf32> to vector<8x8xf32>
    %19 = arith.subf %15, %18 : vector<8x8xf32>
    %20 = math.exp %19 : vector<8x8xf32>
    %cst_14 = arith.constant dense<0.000000e+00> : vector<8xf32>
    %21 = vector.multi_reduction <add>, %20, %cst_14 [1] : vector<8x8xf32> to vector<8xf32>
    %22 = vector.shape_cast %21 : vector<8xf32> to vector<8x1xf32>
    %23 = vector.broadcast %22 : vector<8x1xf32> to vector<8x8xf32>
    %24 = arith.divf %20, %23 : vector<8x8xf32>
    %cst_15 = arith.constant dense<0.000000e+00> : vector<8x12xf32>
    %25 = tpu.matmul %24, %7, %cst_15 {dimension_numbers = #tpu.dot_dimension_numbers<[1], [0], [0], [1], [0, 0, 1, 1], [], []>} : vector<8x8xf32>, vector<8x12xf32>, vector<8x12xf32> -> vector<8x12xf32>
    %c0_16 = arith.constant 0 : index
    %c0_17 = arith.constant 0 : index
    %c0_18 = arith.constant 0 : index
    %26 = vector.load %arg5[%c0_16, %c0_17, %c0_18] : memref<1x8x12xf32, #tpu.memory_space<vmem>>, vector<1x8x12xf32>
    %27 = vector.shape_cast %26 : vector<1x8x12xf32> to vector<8x12xf32>
    %28 = vector.shape_cast %25 : vector<8x12xf32> to vector<1x8x12xf32>
    tpu.vector_store %arg5[%c0_16, %c0_17, %c0_18], %28 {strides = array<i32>} : memref<1x8x12xf32, #tpu.memory_space<vmem>>, vector<1x8x12xf32>,
    return
  }
  func.func @transform_0(%arg0: i32) -> (i32, i32, i32) {
    %c0_i32 = arith.constant 0 : i32
    %c0_i32_0 = arith.constant 0 : i32
    %c0_i32_1 = arith.constant 0 : i32
    return %arg0, %c0_i32, %c0_i32_0 : i32, i32, i32
  }
  func.func @transform_1(%arg0: i32) -> (i32, i32) {
    %c0_i32 = arith.constant 0 : i32
    %c0_i32_0 = arith.constant 0 : i32
    %c0_i32_1 = arith.constant 0 : i32
    return %c0_i32, %c0_i32_0 : i32, i32
  }
  func.func @transform_2(%arg0: i32) -> (i32, i32) {
    %c0_i32 = arith.constant 0 : i32
    %c0_i32_0 = arith.constant 0 : i32
    %c0_i32_1 = arith.constant 0 : i32
    return %c0_i32, %c0_i32_0 : i32, i32
  }
  func.func @transform_3(%arg0: i32) -> (i32, i32) {
    %c0_i32 = arith.constant 0 : i32
    %c0_i32_0 = arith.constant 0 : i32
    %c0_i32_1 = arith.constant 0 : i32
    return %c0_i32, %c0_i32_0 : i32, i32
  }
  func.func @transform_4(%arg0: i32) -> (i32, i32, i32) {
    %c0_i32 = arith.constant 0 : i32
    %c0_i32_0 = arith.constant 0 : i32
    %c0_i32_1 = arith.constant 0 : i32
    return %arg0, %c0_i32, %c0_i32_0 : i32, i32, i32
  }
}

</mosaic_0001>

<llo_original>
// kernel: head_forward.1
$region0: #{head_forward.1}
  #allocation0 [shape = 'u32[]', space=smem, size = 0x4, offset = 0x4, fixed_abs, tag = 'smem constant byte address 0x4 - core index']
  #allocation1 [shape = 'u32[144,128]{1,0:T(1,128)}', space=vmem, size = 0x12000, scoped, tag = 'internal scratch']
  %s0 = inlined_call_operand.vmem [shape: f32[2,8,48], index: 0, kind: input, shape index: {}]
  %s1 = inlined_call_operand.vmem [shape: f32[48,12], index: 1, kind: input, shape index: {}]
  %s2 = inlined_call_operand.vmem [shape: f32[48,12], index: 2, kind: input, shape index: {}]
  %s3 = inlined_call_operand.vmem [shape: f32[48,12], index: 3, kind: input, shape index: {}]
  %s4 = inlined_call_operand.hbm [shape: f32[2,8,12], index: 4, kind: output, shape index: {}]
  %s5 = sld [smem:[#allocation0]]
  $region49: #{head_forward.1} parent=0
    _
  %s7 = ssub.s32 1, %s5
  %s8 = scalar_select 0, %s7, %s5
  $region1: #{head_forward.1} parent=0
    #allocation2 [shape = 'u8[8192]{0}', space=vmem, size = 0x2000, scoped, tag = 'output window, operand 0']
    #allocation3 [shape = 's32[2]{0}', space=sflag, size = 0x8, scoped, tag = 'scoped memory for head_forward.1']
    %9 = vsyncpa [#allocation3], 0
    %s10 = scalar_lea.sflag [#allocation3], 1
    %11 = vsyncpa %s10, 0
    loop: start=0, step=1, limit=4
    $region2: #{head_forward.1} parent=1 // loop_pre_header
      _
    $region3: #{head_forward.1} parent=1 // loop_header
      %s13 = sphi 0, %s17
      %p14 = scmp.ge.s32.totalorder %s13, 4
      %s23 = sphi 0, %s25
      %s26 = sphi 0, %s23
      %s27 = sphi 0, %s26
      %s43 = sphi 0, %s27
      %s47 = sphi 0, %s47
      %s49 = sphi 0, %s47
      %s50 = sphi 0, %s49
      %s64 = sphi 0, %s50
      %s68 = sphi 0, %s68
      %s70 = sphi 0, %s68
      %s71 = sphi 0, %s70
      %s85 = sphi 0, %s71
      %s89 = sphi 0, %s89
      %s91 = sphi 0, %s89
      %s92 = sphi 0, %s91
      %s106 = sphi 0, %s92
      %s112 = sphi 0, %s114
      %s115 = sphi 0, %s112
      %s116 = sphi 0, %s115
      %s132 = sphi 0, %s116
    $region4: #{head_forward.1} parent=1 // loop_header_branch
      %16 = sbr.rel (%p14) target = $region8
    $region5: #{head_forward.1} parent=1 // loop_body
      %s18 = ssub.s32 %s13, 1
      %s19 = ssub.s32 %s13, 2
      %s20 = sadd.s32 %s13, 1
      %s21 = ssub.s32 %s13, %s20
      %p22 = scmp.eq.s32.totalorder %s21, 0
      %s24 = sadd.s32 %s23, 1
      %s25 = scalar_select %p22, %s23, %s24
      %p28 = pneg %p22
      %p29 = scmp.eq.s32.totalorder %s13, 1
      %p30 = por %p28, %p29
      %p31 = scmp.ne.s32.totalorder %s23, %s26
      %p32 = scmp.eq.s32.totalorder %s13, 0
      %p33 = por %p31, %p32
      %p34 = scmp.ne.s32.totalorder %s23, %s26
      %p35 = scmp.eq.s32.totalorder %s18, 1
      %p36 = por %p34, %p35
      %p37 = scmp.ne.s32.totalorder %s26, %s27
      %p38 = scmp.eq.s32.totalorder %s18, 0
      %p39 = por %p37, %p38
      %p40 = scmp.ne.s32.totalorder %s26, %s27
      %p41 = scmp.eq.s32.totalorder %s19, 1
      %p42 = por %p40, %p41
      %p44 = scmp.ne.s32.totalorder %s27, %s43
      %p45 = scmp.eq.s32.totalorder %s19, 0
      %p46 = por %p44, %p45
      %s48 = sadd.s32 %s47, 1
      %p51 = scmp.eq.s32.totalorder %s13, 1
      %p52 = scmp.ne.s32.totalorder %s47, %s49
      %p53 = scmp.eq.s32.totalorder %s13, 0
      %p54 = por %p52, %p53
      %p55 = scmp.ne.s32.totalorder %s47, %s49
      %p56 = scmp.eq.s32.totalorder %s18, 1
      %p57 = por %p55, %p56
      %p58 = scmp.ne.s32.totalorder %s49, %s50
      %p59 = scmp.eq.s32.totalorder %s18, 0
      %p60 = por %p58, %p59
      %p61 = scmp.ne.s32.totalorder %s49, %s50
      %p62 = scmp.eq.s32.totalorder %s19, 1
      %p63 = por %p61, %p62
      %p65 = scmp.ne.s32.totalorder %s50, %s64
      %p66 = scmp.eq.s32.totalorder %s19, 0
      %p67 = por %p65, %p66
      %s69 = sadd.s32 %s68, 1
      %p72 = scmp.eq.s32.totalorder %s13, 1
      %p73 = scmp.ne.s32.totalorder %s68, %s70
      %p74 = scmp.eq.s32.totalorder %s13, 0
      %p75 = por %p73, %p74
      %p76 = scmp.ne.s32.totalorder %s68, %s70
      %p77 = scmp.eq.s32.totalorder %s18, 1
      %p78 = por %p76, %p77
      %p79 = scmp.ne.s32.totalorder %s70, %s71
      %p80 = scmp.eq.s32.totalorder %s18, 0
      %p81 = por %p79, %p80
      %p82 = scmp.ne.s32.totalorder %s70, %s71
      %p83 = scmp.eq.s32.totalorder %s19, 1
      %p84 = por %p82, %p83
      %p86 = scmp.ne.s32.totalorder %s71, %s85
      %p87 = scmp.eq.s32.totalorder %s19, 0
      %p88 = por %p86, %p87
      %s90 = sadd.s32 %s89, 1
      %p93 = scmp.eq.s32.totalorder %s13, 1
      %p94 = scmp.ne.s32.totalorder %s89, %s91
      %p95 = scmp.eq.s32.totalorder %s13, 0
      %p96 = por %p94, %p95
      %p97 = scmp.ne.s32.totalorder %s89, %s91
      %p98 = scmp.eq.s32.totalorder %s18, 1
      %p99 = por %p97, %p98
      %p100 = scmp.ne.s32.totalorder %s91, %s92
      %p101 = scmp.eq.s32.totalorder %s18, 0
      %p102 = por %p100, %p101
      %p103 = scmp.ne.s32.totalorder %s91, %s92
      %p104 = scmp.eq.s32.totalorder %s19, 1
      %p105 = por %p103, %p104
      %p107 = scmp.ne.s32.totalorder %s92, %s106
      %p108 = scmp.eq.s32.totalorder %s19, 0
      %p109 = por %p107, %p108
      %s110 = ssub.s32 %s13, %s20
      %p111 = scmp.eq.s32.totalorder %s110, 0
      %s113 = sadd.s32 %s112, 1
      %s114 = scalar_select %p111, %s112, %s113
      %p117 = pneg %p111
      %p118 = scmp.eq.s32.totalorder %s13, 1
      %p119 = por %p117, %p118
      %p120 = scmp.ne.s32.totalorder %s112, %s115
      %p121 = scmp.eq.s32.totalorder %s13, 0
      %p122 = por %p120, %p121
      %p123 = scmp.ne.s32.totalorder %s112, %s115
      %p124 = scmp.eq.s32.totalorder %s18, 1
      %p125 = por %p123, %p124
      %p126 = scmp.ne.s32.totalorder %s115, %s116
      %p127 = scmp.eq.s32.totalorder %s18, 0
      %p128 = por %p126, %p127
      %p129 = scmp.ne.s32.totalorder %s115, %s116
      %p130 = scmp.eq.s32.totalorder %s19, 1
      %p131 = por %p129, %p130
      %p133 = scmp.ne.s32.totalorder %s116, %s132
      %p134 = scmp.eq.s32.totalorder %s19, 0
      %p135 = por %p133, %p134
      %p136 = scmp.le.s32.totalorder 1, %s13
      %p137 = scmp.lt.s32.totalorder %s13, 3
      %p138 = pnand %p136, %p137
      %p139 = pneg %p138
      // Predicated region
      $region9: #{head_forward.1} parent=5 // pred_check
        _
      $region10: #{head_forward.1} parent=5 // pred_check_branch
        %141 = sbr.rel (%p138) target = $region12
      $region11: #{head_forward.1} parent=5 // pred_region
        %s142 = ssub.s32 %s13, 1
        // Predicated region
        $region13: #{head_forward.1} parent=11 // pred_check
          %p143 = pneg %p60
        $region14: #{head_forward.1} parent=11 // pred_check_branch
          %145 = sbr.rel (%p143) target = $region16
        $region15: #{head_forward.1} parent=11 // pred_region
          _
        $region16: #{head_forward.1} parent=11 // pred_fallthru
          _
        // Predicated region
        $region17: #{head_forward.1} parent=11 // pred_check
          %p146 = pneg %p81
        $region18: #{head_forward.1} parent=11 // pred_check_branch
          %148 = sbr.rel (%p146) target = $region20
        $region19: #{head_forward.1} parent=11 // pred_region
          _
        $region20: #{head_forward.1} parent=11 // pred_fallthru
          _
        // Predicated region
        $region21: #{head_forward.1} parent=11 // pred_check
          %p149 = pneg %p102
        $region22: #{head_forward.1} parent=11 // pred_check_branch
          %151 = sbr.rel (%p149) target = $region24
        $region23: #{head_forward.1} parent=11 // pred_region
          _
        $region24: #{head_forward.1} parent=11 // pred_fallthru
          _
      $region12: #{head_forward.1} parent=5 // pred_fallthru
        _
      %p152 = scmp.lt.s32.totalorder %s13, 2
      // Predicated region
      $region25: #{head_forward.1} parent=5 // pred_check
        %p153 = pneg %p152
      $region26: #{head_forward.1} parent=5 // pred_check_branch
        %155 = sbr.rel (%p153) target = $region28
      $region27: #{head_forward.1} parent=5 // pred_region
        // Predicated region
        $region29: #{head_forward.1} parent=27 // pred_check
          %p156 = pneg %p33
        $region30: #{head_forward.1} parent=27 // pred_check_branch
          %158 = sbr.rel (%p156) target = $region32
        $region31: #{head_forward.1} parent=27 // pred_region
          %p159 = scmp.lt.s32.totalorder %s13, 1
          %s160 = scalar_select %p159, %s13, 1
          %s161 = smul.addr %s160, 8
          %s162 = scalar_lea.vmem %s0, %s161
        $region32: #{head_forward.1} parent=27 // pred_fallthru
          _
      $region28: #{head_forward.1} parent=5 // pred_fallthru
        _
      %p163 = scmp.le.s32.totalorder 1, %s13
      %p164 = scmp.lt.s32.totalorder %s13, 3
      %p165 = pnand %p163, %p164
      %p166 = pneg %p165
      // Predicated region
      $region33: #{head_forward.1} parent=5 // pred_check
        _
      $region34: #{head_forward.1} parent=5 // pred_check_branch
        %168 = sbr.rel (%p165) target = $region36
      $region35: #{head_forward.1} parent=5 // pred_region
        %s169 = ssub.s32 %s13, 1
        %p170 = scmp.lt.s32.totalorder %s18, 1
        %s171 = scalar_select %p170, %s18, 1
        %s172 = smul.addr %s171, 8
        %s173 = scalar_lea.vmem %s0, %s172
        %p174 = pneg %p39
        %p175 = pneg %p36
        %p176 = pneg %p60
        %p177 = pneg %p57
        %p178 = pneg %p81
        %p179 = pneg %p78
        %p180 = pneg %p102
        %p181 = pneg %p99
        %p182 = pneg %p128
        %p183 = pneg %p125
        %s184 = sand.u32 %s115, 1
        %s185 = scalar_lea.sflag [#allocation3], %s184
        %s186 = sand.u32 %s115, 1
        %s187 = smul.addr %s186, 8
        %s188 = scalar_lea.vmem [#allocation2], %s187
        %p189 = scmp.lt.s32.totalorder %s18, 1
        %s190 = scalar_select %p189, %s18, 1
        %s191 = smul.addr %s190, 8
        %s192 = scalar_lea.vmem %s0, %s191
        %v193 = vld [vmem:[%s192] sm:$0xff]
        %v194 = vld [vmem:[%s1] sm:$0xff]
        %v195 = vld [vmem:[%s1 + $0x8] sm:$0xff]
        %v196 = vld [vmem:[%s1 + $0x10] sm:$0xff]
        %v197 = vld [vmem:[%s1 + $0x18] sm:$0xff]
        %v198 = vld [vmem:[%s1 + $0x20] sm:$0xff]
        %v199 = vld [vmem:[%s1 + $0x28] sm:$0xff]
        %v200 = vld [vmem:[%s2] sm:$0xff]
        %v201 = vld [vmem:[%s2 + $0x8] sm:$0xff]
        %v202 = vld [vmem:[%s2 + $0x10] sm:$0xff]
        %v203 = vld [vmem:[%s2 + $0x18] sm:$0xff]
        %v204 = vld [vmem:[%s2 + $0x20] sm:$0xff]
        %v205 = vld [vmem:[%s2 + $0x28] sm:$0xff]
        %v206 = vld [vmem:[%s3] sm:$0xff]
        %v207 = vld [vmem:[%s3 + $0x8] sm:$0xff]
        %v208 = vld [vmem:[%s3 + $0x10] sm:$0xff]
        %v209 = vld [vmem:[%s3 + $0x18] sm:$0xff]
        %v210 = vld [vmem:[%s3 + $0x20] sm:$0xff]
        %v211 = vld [vmem:[%s3 + $0x28] sm:$0xff]
        %vm212 = vcmask 392192
        %v214 = vsel %vm212, %v193, 0
        %216 = vmatprep.subr.mxu0 0.0
        %217 = vmatpush1.msra.mxu0 0.0
        %218 = vmatprep.subr.mxu0 0.0
        %219 = vmatpush1.msra.mxu0 0.0
        %220 = vmatprep.subr.mxu0 0.0
        %221 = vmatpush1.msra.mxu0 0.0
        %222 = vmatprep.subr.mxu0 0.0
        %223 = vmatpush1.msra.mxu0 0.0
        %224 = vmatprep.subr.mxu0 0.0
        %225 = vmatpush1.msra.mxu0 0.0
        %226 = vmatprep.subr.mxu0 0.0
        %227 = vmatpush1.msra.mxu0 0.0
        %228 = vmatprep.subr.mxu0 0.0
        %229 = vmatpush1.msra.mxu0 0.0
        %230 = vmatprep.subr.mxu0 0.0
        %231 = vmatpush1.msra.mxu0 0.0
        %232 = vmatprep.subr.mxu0 0.0
        %233 = vmatpush1.msra.mxu0 0.0
        %234 = vmatprep.subr.mxu0 0.0
        %235 = vmatpush1.msra.mxu0 0.0
        %236 = vmatprep.subr.mxu0 0.0
        %237 = vmatpush1.msra.mxu0 %v199
        %238 = vmatprep.subr.mxu0 0.0
        %239 = vmatpush1.msra.mxu0 %v198
        %240 = vmatprep.subr.mxu0 0.0
        %241 = vmatpush1.msra.mxu0 %v197
        %242 = vmatprep.subr.mxu0 0.0
        %243 = vmatpush1.msra.mxu0 %v196
        %244 = vmatprep.subr.mxu0 0.0
        %245 = vmatpush1.msra.mxu0 %v195
        %246 = vmatprep.subr.mxu0 0.0
        %247 = vmatpush1.msra.mxu0 %v194
        %248 = vmatprep.subr.mxu0 0.0
        %249 = vmatpush2.msra.mxu0 0.0
        %250 = vmatprep.subr.mxu0 0.0
        %251 = vmatpush2.msra.mxu0 0.0
        %252 = vmatprep.subr.mxu0 0.0
        %253 = vmatpush2.msra.mxu0 0.0
        %254 = vmatprep.subr.mxu0 0.0
        %255 = vmatpush2.msra.mxu0 0.0
        %256 = vmatprep.subr.mxu0 0.0
        %257 = vmatpush2.msra.mxu0 0.0
        %258 = vmatprep.subr.mxu0 0.0
        %259 = vmatpush2.msra.mxu0 0.0
        %260 = vmatprep.subr.mxu0 0.0
        %261 = vmatpush2.msra.mxu0 0.0
        %262 = vmatprep.subr.mxu0 0.0
        %263 = vmatpush2.msra.mxu0 0.0
        %264 = vmatprep.subr.mxu0 0.0
        %265 = vmatpush2.msra.mxu0 0.0
        %266 = vmatprep.subr.mxu0 0.0
        %267 = vmatpush2.msra.mxu0 0.0
        %268 = vmatprep.subr.mxu0 0.0
        %269 = vmatpush2.msra.mxu0 0.0
        %270 = vmatprep.subr.mxu0 0.0
        %271 = vmatpush2.msra.mxu0 0.0
        %272 = vmatprep.subr.mxu0 0.0
        %273 = vmatpush2.msra.mxu0 0.0
        %274 = vmatprep.subr.mxu0 0.0
        %275 = vmatpush2.msra.mxu0 0.0
        %276 = vmatprep.subr.mxu0 0.0
        %277 = vmatpush2.msra.mxu0 0.0
        %278 = vmatprep.subr.mxu0 0.0
        %279 = vmatpush2.msra.mxu0 0.0
        %280 = vmatprep.mubr.f32.mxu0 0.0
        %281 = vmatmul.mubr.f32.gmra.mxu0 %v214
        %v282 = vpop.f32.mrf.mxu0
        %v283 = vadd.f32 0.0, %v282
        %v284 = vpop.f32.mrf.mxu0
        %285 = vdwg.mxu0
        %286 = vmatprep.subr.mxu0 0.0
        %287 = vmatpush1.msra.mxu0 0.0
        %288 = vmatprep.subr.mxu0 0.0
        %289 = vmatpush1.msra.mxu0 0.0
        %290 = vmatprep.subr.mxu0 0.0
        %291 = vmatpush1.msra.mxu0 0.0
        %292 = vmatprep.subr.mxu0 0.0
        %293 = vmatpush1.msra.mxu0 0.0
        %294 = vmatprep.subr.mxu0 0.0
        %295 = vmatpush1.msra.mxu0 0.0
        %296 = vmatprep.subr.mxu0 0.0
        %297 = vmatpush1.msra.mxu0 0.0
        %298 = vmatprep.subr.mxu0 0.0
        %299 = vmatpush1.msra.mxu0 0.0
        %300 = vmatprep.subr.mxu0 0.0
        %301 = vmatpush1.msra.mxu0 0.0
        %302 = vmatprep.subr.mxu0 0.0
        %303 = vmatpush1.msra.mxu0 0.0
        %304 = vmatprep.subr.mxu0 0.0
        %305 = vmatpush1.msra.mxu0 0.0
        %306 = vmatprep.subr.mxu0 0.0
        %307 = vmatpush1.msra.mxu0 %v205
        %308 = vmatprep.subr.mxu0 0.0
        %309 = vmatpush1.msra.mxu0 %v204
        %310 = vmatprep.subr.mxu0 0.0
        %311 = vmatpush1.msra.mxu0 %v203
        %312 = vmatprep.subr.mxu0 0.0
        %313 = vmatpush1.msra.mxu0 %v202
        %314 = vmatprep.subr.mxu0 0.0
        %315 = vmatpush1.msra.mxu0 %v201
        %316 = vmatprep.subr.mxu0 0.0
        %317 = vmatpush1.msra.mxu0 %v200
        %318 = vmatprep.subr.mxu0 0.0
        %319 = vmatpush2.msra.mxu0 0.0
        %320 = vmatprep.subr.mxu0 0.0
        %321 = vmatpush2.msra.mxu0 0.0
        %322 = vmatprep.subr.mxu0 0.0
        %323 = vmatpush2.msra.mxu0 0.0
        %324 = vmatprep.subr.mxu0 0.0
        %325 = vmatpush2.msra.mxu0 0.0
        %326 = vmatprep.subr.mxu0 0.0
        %327 = vmatpush2.msra.mxu0 0.0
        %328 = vmatprep.subr.mxu0 0.0
        %329 = vmatpush2.msra.mxu0 0.0
        %330 = vmatprep.subr.mxu0 0.0
        %331 = vmatpush2.msra.mxu0 0.0
        %332 = vmatprep.subr.mxu0 0.0
        %333 = vmatpush2.msra.mxu0 0.0
        %334 = vmatprep.subr.mxu0 0.0
        %335 = vmatpush2.msra.mxu0 0.0
        %336 = vmatprep.subr.mxu0 0.0
        %337 = vmatpush2.msra.mxu0 0.0
        %338 = vmatprep.subr.mxu0 0.0
        %339 = vmatpush2.msra.mxu0 0.0
        %340 = vmatprep.subr.mxu0 0.0
        %341 = vmatpush2.msra.mxu0 0.0
        %342 = vmatprep.subr.mxu0 0.0
        %343 = vmatpush2.msra.mxu0 0.0
        %344 = vmatprep.subr.mxu0 0.0
        %345 = vmatpush2.msra.mxu0 0.0
        %346 = vmatprep.subr.mxu0 0.0
        %347 = vmatpush2.msra.mxu0 0.0
        %348 = vmatprep.subr.mxu0 0.0
        %349 = vmatpush2.msra.mxu0 0.0
        %350 = vmatprep.mubr.f32.mxu0 0.0
        %351 = vmatmul.mubr.f32.gmra.mxu0 %v214
        %v352 = vpop.f32.mrf.mxu0
        %v353 = vadd.f32 0.0, %v352
        %v354 = vpop.f32.mrf.mxu0
        %355 = vdwg.mxu0
        %356 = vmatprep.subr.mxu0 0.0
        %357 = vmatpush1.msra.mxu0 0.0
        %358 = vmatprep.subr.mxu0 0.0
        %359 = vmatpush1.msra.mxu0 0.0
        %360 = vmatprep.subr.mxu0 0.0
        %361 = vmatpush1.msra.mxu0 0.0
        %362 = vmatprep.subr.mxu0 0.0
        %363 = vmatpush1.msra.mxu0 0.0
        %364 = vmatprep.subr.mxu0 0.0
        %365 = vmatpush1.msra.mxu0 0.0
        %366 = vmatprep.subr.mxu0 0.0
        %367 = vmatpush1.msra.mxu0 0.0
        %368 = vmatprep.subr.mxu0 0.0
        %369 = vmatpush1.msra.mxu0 0.0
        %370 = vmatprep.subr.mxu0 0.0
        %371 = vmatpush1.msra.mxu0 0.0
        %372 = vmatprep.subr.mxu0 0.0
        %373 = vmatpush1.msra.mxu0 0.0
        %374 = vmatprep.subr.mxu0 0.0
        %375 = vmatpush1.msra.mxu0 0.0
        %376 = vmatprep.subr.mxu0 0.0
        %377 = vmatpush1.msra.mxu0 %v211
        %378 = vmatprep.subr.mxu0 0.0
        %379 = vmatpush1.msra.mxu0 %v210
        %380 = vmatprep.subr.mxu0 0.0
        %381 = vmatpush1.msra.mxu0 %v209
        %382 = vmatprep.subr.mxu0 0.0
        %383 = vmatpush1.msra.mxu0 %v208
        %384 = vmatprep.subr.mxu0 0.0
        %385 = vmatpush1.msra.mxu0 %v207
        %386 = vmatprep.subr.mxu0 0.0
        %387 = vmatpush1.msra.mxu0 %v206
        %388 = vmatprep.subr.mxu0 0.0
        %389 = vmatpush2.msra.mxu0 0.0
        %390 = vmatprep.subr.mxu0 0.0
        %391 = vmatpush2.msra.mxu0 0.0
        %392 = vmatprep.subr.mxu0 0.0
        %393 = vmatpush2.msra.mxu0 0.0
        %394 = vmatprep.subr.mxu0 0.0
        %395 = vmatpush2.msra.mxu0 0.0
        %396 = vmatprep.subr.mxu0 0.0
        %397 = vmatpush2.msra.mxu0 0.0
        %398 = vmatprep.subr.mxu0 0.0
        %399 = vmatpush2.msra.mxu0 0.0
        %400 = vmatprep.subr.mxu0 0.0
        %401 = vmatpush2.msra.mxu0 0.0
        %402 = vmatprep.subr.mxu0 0.0
        %403 = vmatpush2.msra.mxu0 0.0
        %404 = vmatprep.subr.mxu0 0.0
        %405 = vmatpush2.msra.mxu0 0.0
        %406 = vmatprep.subr.mxu0 0.0
        %407 = vmatpush2.msra.mxu0 0.0
        %408 = vmatprep.subr.mxu0 0.0
        %409 = vmatpush2.msra.mxu0 0.0
        %410 = vmatprep.subr.mxu0 0.0
        %411 = vmatpush2.msra.mxu0 0.0
        %412 = vmatprep.subr.mxu0 0.0
        %413 = vmatpush2.msra.mxu0 0.0
        %414 = vmatprep.subr.mxu0 0.0
        %415 = vmatpush2.msra.mxu0 0.0
        %416 = vmatprep.subr.mxu0 0.0
        %417 = vmatpush2.msra.mxu0 0.0
        %418 = vmatprep.subr.mxu0 0.0
        %419 = vmatpush2.msra.mxu0 0.0
        %420 = vmatprep.mubr.f32.mxu0 0.0
        %421 = vmatmul.mubr.f32.gmra.mxu0 %v214
        %v422 = vpop.f32.mrf.mxu0
        %v423 = vadd.f32 0.0, %v422
        %v424 = vpop.f32.mrf.mxu0
        %425 = vdwg.mxu0
        %vm426 = vcmask 97280
        %v428 = vsel %vm426, %v283, 0
        %v431 = vsel %vm426, %v353, 0
        %433 = vmatprep.subr.mxu0 0.0
        %434 = vmatpush1.xpose.msra.mxu0 0.0
        %435 = vmatprep.subr.mxu0 0.0
        %436 = vmatpush1.xpose.msra.mxu0 0.0
        %437 = vmatprep.subr.mxu0 0.0
        %438 = vmatpush1.xpose.msra.mxu0 0.0
        %439 = vmatprep.subr.mxu0 0.0
        %440 = vmatpush1.xpose.msra.mxu0 0.0
        %441 = vmatprep.subr.mxu0 0.0
        %442 = vmatpush1.xpose.msra.mxu0 0.0
        %443 = vmatprep.subr.mxu0 0.0
        %444 = vmatpush1.xpose.msra.mxu0 0.0
        %445 = vmatprep.subr.mxu0 0.0
        %446 = vmatpush1.xpose.msra.mxu0 0.0
        %447 = vmatprep.subr.mxu0 0.0
        %448 = vmatpush1.xpose.msra.mxu0 0.0
        %449 = vmatprep.subr.mxu0 0.0
        %450 = vmatpush1.xpose.msra.mxu0 0.0
        %451 = vmatprep.subr.mxu0 0.0
        %452 = vmatpush1.xpose.msra.mxu0 0.0
        %453 = vmatprep.subr.mxu0 0.0
        %454 = vmatpush1.xpose.msra.mxu0 0.0
        %455 = vmatprep.subr.mxu0 0.0
        %456 = vmatpush1.xpose.msra.mxu0 0.0
        %457 = vmatprep.subr.mxu0 0.0
        %458 = vmatpush1.xpose.msra.mxu0 0.0
        %459 = vmatprep.subr.mxu0 0.0
        %460 = vmatpush1.xpose.msra.mxu0 0.0
        %461 = vmatprep.subr.mxu0 0.0
        %462 = vmatpush1.xpose.msra.mxu0 0.0
        %463 = vmatprep.subr.mxu0 0.0
        %464 = vmatpush1.xpose.msra.mxu0 %v431
        %465 = vmatprep.subr.mxu0 0.0
        %466 = vmatpush2.xpose.msra.mxu0 0.0
        %467 = vmatprep.subr.mxu0 0.0
        %468 = vmatpush2.xpose.msra.mxu0 0.0
        %469 = vmatprep.subr.mxu0 0.0
        %470 = vmatpush2.xpose.msra.mxu0 0.0
        %471 = vmatprep.subr.mxu0 0.0
        %472 = vmatpush2.xpose.msra.mxu0 0.0
        %473 = vmatprep.subr.mxu0 0.0
        %474 = vmatpush2.xpose.msra.mxu0 0.0
        %475 = vmatprep.subr.mxu0 0.0
        %476 = vmatpush2.xpose.msra.mxu0 0.0
        %477 = vmatprep.subr.mxu0 0.0
        %478 = vmatpush2.xpose.msra.mxu0 0.0
        %479 = vmatprep.subr.mxu0 0.0
        %480 = vmatpush2.xpose.msra.mxu0 0.0
        %481 = vmatprep.subr.mxu0 0.0
        %482 = vmatpush2.xpose.msra.mxu0 0.0
        %483 = vmatprep.subr.mxu0 0.0
        %484 = vmatpush2.xpose.msra.mxu0 0.0
        %485 = vmatprep.subr.mxu0 0.0
        %486 = vmatpush2.xpose.msra.mxu0 0.0
        %487 = vmatprep.subr.mxu0 0.0
        %488 = vmatpush2.xpose.msra.mxu0 0.0
        %489 = vmatprep.subr.mxu0 0.0
        %490 = vmatpush2.xpose.msra.mxu0 0.0
        %491 = vmatprep.subr.mxu0 0.0
        %492 = vmatpush2.xpose.msra.mxu0 0.0
        %493 = vmatprep.subr.mxu0 0.0
        %494 = vmatpush2.xpose.msra.mxu0 0.0
        %495 = vmatprep.subr.mxu0 0.0
        %496 = vmatpush2.xpose.msra.mxu0 0.0
        %497 = vmatprep.mubr.f32.mxu0 0.0
        %498 = vmatmul.mubr.f32.gmra.mxu0 %v428
        %v499 = vpop.f32.mrf.mxu0
        %v500 = vadd.f32 0.0, %v499
        %v501 = vpop.f32.mrf.mxu0
        %502 = vdwg.mxu0
        %v503 = vmul.f32 %v500, 0.14433756
        %v504 = vlaneseq
        %v505 = vshrl.u32 %v504, 7
        %v506 = vlaneseq
        %v507 = vand.u32 %v506, 127
        %vm508 = vcmp.le.s32.totalorder %v507, %v505
        %v509 = vsel %vm508, %v503, -inf
        %vm510 = vcmask 64512
        %v511 = vsel %vm510, %v509, -inf
        %512 = vmax.xlane.f32.xlu0 %v511
        %v513 = vpop.xlane.xlu0 %512
        %v514 = vsub.f32 %v509, %v513
        %v515 = vmul.f32 %v514, 1.442695
        %v516 = vpow.pop %v515
        %v517 = vsel %vm510, %v516, 0.0
        %518 = vadd.xlane.f32.xlu0 %v517
        %v519 = vpop.xlane.xlu0 %518
        %v520 = vrcp.pop %v519
        %v521 = vmul.f32 %v516, %v520
        %v523 = vsel %vm510, %v521, 0
        %525 = vmatprep.subr.mxu0 0.0
        %526 = vmatpush1.msra.mxu0 0.0
        %527 = vmatprep.subr.mxu0 0.0
        %528 = vmatpush1.msra.mxu0 0.0
        %529 = vmatprep.subr.mxu0 0.0
        %530 = vmatpush1.msra.mxu0 0.0
        %531 = vmatprep.subr.mxu0 0.0
        %532 = vmatpush1.msra.mxu0 0.0
        %533 = vmatprep.subr.mxu0 0.0
        %534 = vmatpush1.msra.mxu0 0.0
        %535 = vmatprep.subr.mxu0 0.0
        %536 = vmatpush1.msra.mxu0 0.0
        %537 = vmatprep.subr.mxu0 0.0
        %538 = vmatpush1.msra.mxu0 0.0
        %539 = vmatprep.subr.mxu0 0.0
        %540 = vmatpush1.msra.mxu0 0.0
        %541 = vmatprep.subr.mxu0 0.0
        %542 = vmatpush1.msra.mxu0 0.0
        %543 = vmatprep.subr.mxu0 0.0
        %544 = vmatpush1.msra.mxu0 0.0
        %545 = vmatprep.subr.mxu0 0.0
        %546 = vmatpush1.msra.mxu0 0.0
        %547 = vmatprep.subr.mxu0 0.0
        %548 = vmatpush1.msra.mxu0 0.0
        %549 = vmatprep.subr.mxu0 0.0
        %550 = vmatpush1.msra.mxu0 0.0
        %551 = vmatprep.subr.mxu0 0.0
        %552 = vmatpush1.msra.mxu0 0.0
        %553 = vmatprep.subr.mxu0 0.0
        %554 = vmatpush1.msra.mxu0 0.0
        %555 = vmatprep.subr.mxu0 0.0
        %556 = vmatpush1.msra.mxu0 %v423
        %557 = vmatprep.subr.mxu0 0.0
        %558 = vmatpush2.msra.mxu0 0.0
        %559 = vmatprep.subr.mxu0 0.0
        %560 = vmatpush2.msra.mxu0 0.0
        %561 = vmatprep.subr.mxu0 0.0
        %562 = vmatpush2.msra.mxu0 0.0
        %563 = vmatprep.subr.mxu0 0.0
        %564 = vmatpush2.msra.mxu0 0.0
        %565 = vmatprep.subr.mxu0 0.0
        %566 = vmatpush2.msra.mxu0 0.0
        %567 = vmatprep.subr.mxu0 0.0
        %568 = vmatpush2.msra.mxu0 0.0
        %569 = vmatprep.subr.mxu0 0.0
        %570 = vmatpush2.msra.mxu0 0.0
        %571 = vmatprep.subr.mxu0 0.0
        %572 = vmatpush2.msra.mxu0 0.0
        %573 = vmatprep.subr.mxu0 0.0
        %574 = vmatpush2.msra.mxu0 0.0
        %575 = vmatprep.subr.mxu0 0.0
        %576 = vmatpush2.msra.mxu0 0.0
        %577 = vmatprep.subr.mxu0 0.0
        %578 = vmatpush2.msra.mxu0 0.0
        %579 = vmatprep.subr.mxu0 0.0
        %580 = vmatpush2.msra.mxu0 0.0
        %581 = vmatprep.subr.mxu0 0.0
        %582 = vmatpush2.msra.mxu0 0.0
        %583 = vmatprep.subr.mxu0 0.0
        %584 = vmatpush2.msra.mxu0 0.0
        %585 = vmatprep.subr.mxu0 0.0
        %586 = vmatpush2.msra.mxu0 0.0
        %587 = vmatprep.subr.mxu0 0.0
        %588 = vmatpush2.msra.mxu0 0.0
        %589 = vmatprep.mubr.f32.mxu0 0.0
        %590 = vmatmul.mubr.f32.gmra.mxu0 %v523
        %v591 = vpop.f32.mrf.mxu0
        %v592 = vadd.f32 0.0, %v591
        %v593 = vpop.f32.mrf.mxu0
        %594 = vdwg.mxu0
        %595 = vst.msk [vmem:[%s188] sm:$0xff] %vm426, %v592
        %s596 = sand.u32 %s115, 1
        %s597 = scalar_lea.sflag [#allocation3], %s596
        %s598 = sand.u32 %s115, 1
        %s599 = smul.addr %s598, 8
        %s600 = scalar_lea.vmem [#allocation2], %s599
        // Predicated region
        $region37: #{head_forward.1} parent=35 // pred_check
          %p601 = pneg %p125
        $region38: #{head_forward.1} parent=35 // pred_check_branch
          %603 = sbr.rel (%p601) target = $region40
        $region39: #{head_forward.1} parent=35 // pred_region
          %s605 = ssub.s32 128, 128
          %606 = vsyncadd %s597, %s605
          %s607 = smul.addr %s18, 128
          %s608 = scalar_lea.hbm %s4, %s607
          %s610 = sshll.u32 %s600, 4
          %s611 = int_to_ptr.vmem [resolvable:$true] %s610
          %613 = dma.vmem_to_hbm [thread:$0]  %s611, 128, %s608, %s597
        $region40: #{head_forward.1} parent=35 // pred_fallthru
          _
      $region36: #{head_forward.1} parent=5 // pred_fallthru
        _
      %p614 = scmp.le.s32.totalorder 2, %s13
      // Predicated region
      $region41: #{head_forward.1} parent=5 // pred_check
        %p615 = pneg %p614
      $region42: #{head_forward.1} parent=5 // pred_check_branch
        %617 = sbr.rel (%p615) target = $region44
      $region43: #{head_forward.1} parent=5 // pred_region
        %s618 = ssub.s32 %s13, 2
        // Predicated region
        $region45: #{head_forward.1} parent=43 // pred_check
          %p619 = pneg %p131
        $region46: #{head_forward.1} parent=43 // pred_check_branch
          %621 = sbr.rel (%p619) target = $region48
        $region47: #{head_forward.1} parent=43 // pred_region
          %s622 = sand.u32 %s116, 1
          %s623 = scalar_lea.sflag [#allocation3], %s622
          %s624 = sand.u32 %s116, 1
          %s625 = smul.addr %s624, 8
          %s626 = scalar_lea.vmem [#allocation2], %s625
          %627 = dma.done %s623, 128
        $region48: #{head_forward.1} parent=43 // pred_fallthru
          _
      $region44: #{head_forward.1} parent=5 // pred_fallthru
        _
    $region6: #{head_forward.1} parent=1 // loop_footer
      %s17 = sadd.s32 1, %s13
    $region7: #{head_forward.1} parent=1 // loop_footer_branch
      %12 = sbr.rel target = $region3
    $region8: #{head_forward.1} parent=1 // loop_exit
      _
    %628 = vsyncpa [#allocation3], 1
    %s629 = scalar_lea.sflag [#allocation3], 1
    %630 = vsyncpa %s629, 1

</llo_original>
